<compile_context>
chip_gen: v7x
topology: tpu7x:2x2x1
jax: 0.10.0
libtpu: 0.0.40
codegen_flags: <defaults>
</compile_context>

<pallas_src>
import functools

import jax
import jax.numpy as jnp
from jax.experimental import pallas as pl
from jax.experimental.pallas import tpu as pltpu

# --- deterministic hardcoded parameters (exactly the values set in load()) ---
LOGIC_W = ((2.077, 2.197), (-0.02, -0.25))      # logics[0].weight (2,2,1,1)
LOGIC_B = (-2.022, 1.978)                       # logics[0].bias   (2,)
OUT_W = 9.0                                     # output.weight (1,2,1,1) == [[9.],[9.]]
OUT_B = -16.0                                   # output.bias   (1,)

_BLOCK_BYTES = 3 * 1024 * 1024      # per-operand block budget (f32); ~4x fits v5e's 16 MiB
_MIN_SPLIT_BLOCK = 512 * 1024       # only split into >=2 grid steps when each block still
                                    # amortises the ~0.35 us per-step overhead
_MAX_FLAT_CELLS = 1 << 20           # cells per board; above this -> row-tiled path


def _logics_and_output(x, nbr, logic_dtype):
    """logics[0] 1x1 conv (2->2) + tanh, then output 1x1 conv (2->1, w=[9,9]) + tanh."""
    xc = x.astype(logic_dtype)
    nc = nbr.astype(logic_dtype)
    t0 = jnp.tanh(LOGIC_W[0][0] * xc + LOGIC_W[0][1] * nc + LOGIC_B[0])
    t1 = jnp.tanh(LOGIC_W[1][0] * xc + LOGIC_W[1][1] * nc + LOGIC_B[1])
    s = t0.astype(jnp.float32) + t1.astype(jnp.float32)
    return jnp.tanh(OUT_W * s + OUT_B)            # both output weights are 9.0 -> one multiply


def _gol_flat_kernel(x_ref, o_ref, *, W, logic_dtype):
    """Batched path: x_ref is (bg, N) with N = H*W; each sublane row = one flattened board."""
    x = jnp.tanh(x_ref[...].astype(jnp.float32))  # torch.tanh(x); input 1x1 conv (w=1) folded
    _, N = x.shape

    # Column index of every flattened cell, in f32.  Exact because the batched path caps
    # boards at <= 2^20 cells, so (i + 0.5) * (1/W) stays well within f32's exact-integer /
    # rounding margins (needs (H*W + W) < 2^22).
    i_f = jax.lax.broadcasted_iota(jnp.int32, x.shape, 1).astype(jnp.float32)
    col = i_f - W * jnp.floor((i_f + 0.5) * (1.0 / W))
    is_c0 = col < 0.5            # board column 0
    is_cw = col > W - 1.5        # board column W-1

    # Horizontal circular 3-sum.  roll(x, 1) is the left neighbour except at column 0, where
    # the torus wants the same row's last column (offset +W-1); mirrored for the right side.
    left = jnp.where(is_c0, pltpu.roll(x, (N - W + 1) % N, 1), pltpu.roll(x, 1 % N, 1))
    right = jnp.where(is_cw, pltpu.roll(x, (W - 1) % N, 1), pltpu.roll(x, (N - 1) % N, 1))
    row = x + left + right

    # Vertical: +-W along the flattened board axis is exactly the circular row shift
    # (including the wrap at rows 0 / H-1), so no seam fix-up is needed.
    nbr = row + pltpu.roll(row, W % N, 1) + pltpu.roll(row, (N - W) % N, 1) - x

    o_ref[...] = _logics_and_output(x, nbr, logic_dtype).astype(o_ref.dtype)


def _gol_rows_kernel(x_ref, halo_ref, o_ref, *, logic_dtype):
    """Row-tiled path: x_ref is an (Hb, W) stripe of one board; halo_ref rows 0/1 hold the
    circular rows just above / below the stripe (remaining rows are alignment padding)."""
    x = jnp.tanh(x_ref[...].astype(jnp.float32))
    top = jnp.tanh(halo_ref[0:1, :].astype(jnp.float32))
    bot = jnp.tanh(halo_ref[1:2, :].astype(jnp.float32))
    Hb, W = x.shape

    def hsum(v):  # horizontal circular 3-sum (W is the real lane axis here -> plain rolls)
        return v + pltpu.roll(v, 1 % W, 1) + pltpu.roll(v, (W - 1) % W, 1)

    row, row_t, row_b = hsum(x), hsum(top), hsum(bot)
    rix = jax.lax.broadcasted_iota(jnp.int32, x.shape, 0)
    above = jnp.where(rix == 0, row_t, pltpu.roll(row, 1 % Hb, 0))
    below = jnp.where(rix == Hb - 1, row_b, pltpu.roll(row, (Hb - 1) % Hb, 0))
    nbr = above + row + below - x

    o_ref[...] = _logics_and_output(x, nbr, logic_dtype).astype(o_ref.dtype)


def _boards_per_block(B, cells, block_bytes):
    per_board = cells * 4
    max_bg = max(1, block_bytes // per_board)
    divisors = [d for d in range(1, B + 1) if B % d == 0 and d <= max_bg]
    bg = divisors[-1]
    if bg == B:
        # Prefer >=2 grid steps (pipelining / v7x's second TensorCore) but ONLY when each
        # resulting block still carries enough work to amortise the per-step overhead.
        smaller = [d for d in divisors if d < B and d * per_board >= _MIN_SPLIT_BLOCK]
        if smaller:
            bg = smaller[-1]
    return bg


def _rows_per_block(H, W, block_bytes):
    max_rows = max(8, block_bytes // (W * 4))
    good = [d for d in range(1, H + 1)
            if H % d == 0 and d <= max_rows and (d % 8 == 0 or d == H)]
    if good:
        return good[-1]
    # TODO(synk): stripe heights that are not multiples of 8 rely on Mosaic sublane padding;
    #             no aligned divisor of H fits the budget here, so take the largest that does.
    return max(d for d in range(1, H + 1) if H % d == 0 and d <= max_rows)


def game_of_life_hardcoded_tanh(x, *, out_dtype=jnp.float32,
                                block_bytes=_BLOCK_BYTES, logics_in_bf16=False):
    """Forward pass of GameOfLifeHardcodedTanh.

    x: (B, 1, H, W) board, float32 or bfloat16.  Returns (B, 1, H, W) in `out_dtype`
    (default float32 for strict parity; pass jnp.bfloat16 to halve store-side HBM traffic).
    `logics_in_bf16=True` computes the two inner tanhs in bf16 (EUP relief on v6e/v7x).
    """
    B, C, H, W = x.shape
    assert C == 1, "GameOfLifeHardcodedTanh takes a single-channel board"
    if x.dtype not in (jnp.float32, jnp.bfloat16):
        x = x.astype(jnp.float32)           # f32/bf16 go straight through; cast in-kernel
    logic_dtype = jnp.bfloat16 if logics_in_bf16 else jnp.float32

    cells = H * W
    elems = B * cells
    cost = pl.CostEstimate(
        flops=16 * elems,
        transcendentals=4 * elems,
        bytes_accessed=elems * x.dtype.itemsize + elems * jnp.dtype(out_dtype).itemsize,
    )
    # TODO(synk): on v7x verify the leading grid axis shards across both TensorCores; if
    #             xprof shows one TC idle, switch that axis to pltpu.CORE_PARALLEL.

    if cells * 4 <= min(block_bytes, _MAX_FLAT_CELLS * 4):
        # ---- batched path: many boards per block, boards flattened along the lane axis ----
        bg = _boards_per_block(B, cells, block_bytes)
        g = B // bg
        xs = x.reshape(g, bg, cells)        # contiguous reshape: no extra HBM round trip
        out = pl.pallas_call(
            functools.partial(_gol_flat_kernel, W=W, logic_dtype=logic_dtype),
            out_shape=jax.ShapeDtypeStruct((g, bg, cells), out_dtype),
            grid=(g,),
            in_specs=[pl.BlockSpec((None, bg, cells), lambda i: (i, 0, 0))],
            out_specs=pl.BlockSpec((None, bg, cells), lambda i: (i, 0, 0)),
            compiler_params=pltpu.CompilerParams(dimension_semantics=("parallel",)),
            cost_estimate=cost,
        )(xs)
        return out.reshape(B, 1, H, W)

    # ---- row-tiled path: boards too large for one VMEM block are streamed as row stripes
    #      with circular halo rows (gathered once; ~8/Hb of the input, negligible) ----
    xs = x.reshape(B, H, W)
    Hb = _rows_per_block(H, W, block_bytes)
    nt = H // Hb
    stripes = jnp.arange(nt)
    rows_top = (stripes * Hb + H - 1) % H
    rows_bot = ((stripes + 1) * Hb) % H
    halo_rows = jnp.stack([rows_top, rows_bot] + [rows_top] * 6, axis=1)   # (nt, 8): pad to 8
    halos = xs[:, halo_rows, :]                                            # (B, nt, 8, W)
    out = pl.pallas_call(
        functools.partial(_gol_rows_kernel, logic_dtype=logic_dtype),
        out_shape=jax.ShapeDtypeStruct((B, H, W), out_dtype),
        grid=(B, nt),
        in_specs=[pl.BlockSpec((None, Hb, W), lambda b, s: (b, s, 0)),
                  pl.BlockSpec((None, None, 8, W), lambda b, s: (b, s, 0, 0))],
        out_specs=pl.BlockSpec((None, Hb, W), lambda b, s: (b, s, 0)),
        compiler_params=pltpu.CompilerParams(dimension_semantics=("parallel", "parallel")),
        cost_estimate=cost,
    )(xs, halos)
    return out.reshape(B, 1, H, W)


def _reference(x):
    """Pure-JAX reference of the PyTorch forward (NCHW)."""
    x = jnp.tanh(x.astype(jnp.float32))
    nbr = sum(
        jnp.roll(x, (dh, dw), axis=(2, 3))
        for dh in (-1, 0, 1)
        for dw in (-1, 0, 1)
        if (dh, dw) != (0, 0)
    )
    t0 = jnp.tanh(LOGIC_W[0][0] * x + LOGIC_W[0][1] * nbr + LOGIC_B[0])
    t1 = jnp.tanh(LOGIC_W[1][0] * x + LOGIC_W[1][1] * nbr + LOGIC_B[1])
    return jnp.tanh(OUT_W * (t0 + t1) + OUT_B)


if __name__ == "__main__":
    key = jax.random.PRNGKey(0)

    # Case 1: tiny batch -> single-block batched path (no wrapper transposes at all).
    b1 = jax.random.bernoulli(key, 0.4, (2, 1, 16, 16)).astype(jnp.float32)
    o1 = jax.block_until_ready(game_of_life_hardcoded_tanh(b1))
    r1 = _reference(b1)
    assert o1.shape == b1.shape and o1.dtype == jnp.float32
    if not jnp.allclose(o1, r1, atol=1e-4):
        raise AssertionError("case 1: Pallas kernel does not match reference forward pass")

    # Case 2: larger batch; still a single lane-dense block (split heuristic must NOT
    # force extra grid steps on this tiny workload).
    b2 = jax.random.bernoulli(jax.random.fold_in(key, 1), 0.4, (32, 1, 16, 16))
    b2 = b2.astype(jnp.float32)
    o2 = jax.block_until_ready(game_of_life_hardcoded_tanh(b2))
    if not jnp.allclose(o2, _reference(b2), atol=1e-4):
        raise AssertionError("case 2: Pallas kernel does not match reference forward pass")

    # Case 3: force the row-tiled (circular-halo) big-board path with a small block budget
    # (block_bytes=4096 -> 8-row stripes, grid (1, 4)).
    b3 = jax.random.bernoulli(jax.random.fold_in(key, 2), 0.4, (1, 1, 32, 128))
    b3 = b3.astype(jnp.float32)
    o3 = jax.block_until_ready(game_of_life_hardcoded_tanh(b3, block_bytes=4096))
    if not jnp.allclose(o3, _reference(b3), atol=1e-4):
        raise AssertionError("case 3: Pallas kernel does not match reference forward pass")

    print("KERNEL_OK")
</pallas_src>

<mosaic_0001>
module attributes {stable_mosaic.version = 11 : i64} {
  func.func @_gol_flat_kernel(%arg0: i32, %arg1: memref<1x2x256xf32, #tpu.memory_space<vmem>>, %arg2: memref<1x2x256xf32, #tpu.memory_space<vmem>>) attributes {dimension_semantics = [#tpu.dimension_semantics<parallel>], iteration_bounds = array<i64: 1>, scalar_prefetch = 0 : i64, scratch_operands = 0 : i64, tpu.core_type = #tpu.core_type<tc>, window_params = [{transform_indices = @transform_0, window_bounds = array<i64: 1, 2, 256>}, {transform_indices = @transform_1, window_bounds = array<i64: 1, 2, 256>}]} {
    %c0 = arith.constant 0 : index
    %c0_0 = arith.constant 0 : index
    %c0_1 = arith.constant 0 : index
    %0 = vector.load %arg1[%c0, %c0_0, %c0_1] : memref<1x2x256xf32, #tpu.memory_space<vmem>>, vector<1x2x256xf32>
    %1 = vector.shape_cast %0 : vector<1x2x256xf32> to vector<2x256xf32>
    %2 = math.tanh %1 : vector<2x256xf32>
    %3 = tpu.iota {dimensions = array<i32: 1>} : vector<2x256xi32>
    %4 = arith.sitofp %3 : vector<2x256xi32> to vector<2x256xf32>
    %cst = arith.constant 5.000000e-01 : f32
    %5 = vector.broadcast %cst : f32 to vector<2x256xf32>
    %6 = arith.addf %4, %5 : vector<2x256xf32>
    %cst_2 = arith.constant 6.250000e-02 : f32
    %7 = vector.broadcast %cst_2 : f32 to vector<2x256xf32>
    %8 = arith.mulf %6, %7 : vector<2x256xf32>
    %9 = math.floor %8 : vector<2x256xf32>
    %cst_3 = arith.constant 1.600000e+01 : f32
    %10 = vector.broadcast %cst_3 : f32 to vector<2x256xf32>
    %11 = arith.mulf %10, %9 : vector<2x256xf32>
    %12 = arith.subf %4, %11 : vector<2x256xf32>
    %cst_4 = arith.constant 5.000000e-01 : f32
    %13 = vector.broadcast %cst_4 : f32 to vector<2x256xf32>
    %14 = arith.cmpf olt, %12, %13 : vector<2x256xf32>
    %cst_5 = arith.constant 1.450000e+01 : f32
    %15 = vector.broadcast %cst_5 : f32 to vector<2x256xf32>
    %16 = arith.cmpf ogt, %12, %15 : vector<2x256xf32>
    %c241_i32 = arith.constant 241 : i32
    %17 = tpu.dynamic_rotate %2 by %c241_i32 dim 1 : vector<2x256xf32>, i32 -> vector<2x256xf32>
    %c1_i32 = arith.constant 1 : i32
    %18 = tpu.dynamic_rotate %2 by %c1_i32 dim 1 : vector<2x256xf32>, i32 -> vector<2x256xf32>
    %19 = arith.select %14, %17, %18 : vector<2x256xi1>, vector<2x256xf32>
    %c15_i32 = arith.constant 15 : i32
    %20 = tpu.dynamic_rotate %2 by %c15_i32 dim 1 : vector<2x256xf32>, i32 -> vector<2x256xf32>
    %c255_i32 = arith.constant 255 : i32
    %21 = tpu.dynamic_rotate %2 by %c255_i32 dim 1 : vector<2x256xf32>, i32 -> vector<2x256xf32>
    %22 = arith.select %16, %20, %21 : vector<2x256xi1>, vector<2x256xf32>
    %23 = arith.addf %2, %19 : vector<2x256xf32>
    %24 = arith.addf %23, %22 : vector<2x256xf32>
    %c16_i32 = arith.constant 16 : i32
    %25 = tpu.dynamic_rotate %24 by %c16_i32 dim 1 : vector<2x256xf32>, i32 -> vector<2x256xf32>
    %26 = arith.addf %24, %25 : vector<2x256xf32>
    %c240_i32 = arith.constant 240 : i32
    %27 = tpu.dynamic_rotate %24 by %c240_i32 dim 1 : vector<2x256xf32>, i32 -> vector<2x256xf32>
    %28 = arith.addf %26, %27 : vector<2x256xf32>
    %29 = arith.subf %28, %2 : vector<2x256xf32>
    %cst_6 = arith.constant 2.077000e+00 : f32
    %30 = vector.broadcast %cst_6 : f32 to vector<2x256xf32>
    %31 = arith.mulf %30, %2 : vector<2x256xf32>
    %cst_7 = arith.constant 2.197000e+00 : f32
    %32 = vector.broadcast %cst_7 : f32 to vector<2x256xf32>
    %33 = arith.mulf %32, %29 : vector<2x256xf32>
    %34 = arith.addf %31, %33 : vector<2x256xf32>
    %cst_8 = arith.constant -2.022000e+00 : f32
    %35 = vector.broadcast %cst_8 : f32 to vector<2x256xf32>
    %36 = arith.addf %34, %35 : vector<2x256xf32>
    %37 = math.tanh %36 : vector<2x256xf32>
    %cst_9 = arith.constant -2.000000e-02 : f32
    %38 = vector.broadcast %cst_9 : f32 to vector<2x256xf32>
    %39 = arith.mulf %38, %2 : vector<2x256xf32>
    %cst_10 = arith.constant -2.500000e-01 : f32
    %40 = vector.broadcast %cst_10 : f32 to vector<2x256xf32>
    %41 = arith.mulf %40, %29 : vector<2x256xf32>
    %42 = arith.addf %39, %41 : vector<2x256xf32>
    %cst_11 = arith.constant 1.978000e+00 : f32
    %43 = vector.broadcast %cst_11 : f32 to vector<2x256xf32>
    %44 = arith.addf %42, %43 : vector<2x256xf32>
    %45 = math.tanh %44 : vector<2x256xf32>
    %46 = arith.addf %37, %45 : vector<2x256xf32>
    %cst_12 = arith.constant 9.000000e+00 : f32
    %47 = vector.broadcast %cst_12 : f32 to vector<2x256xf32>
    %48 = arith.mulf %47, %46 : vector<2x256xf32>
    %cst_13 = arith.constant -1.600000e+01 : f32
    %49 = vector.broadcast %cst_13 : f32 to vector<2x256xf32>
    %50 = arith.addf %48, %49 : vector<2x256xf32>
    %51 = math.tanh %50 : vector<2x256xf32>
    %c0_14 = arith.constant 0 : index
    %c0_15 = arith.constant 0 : index
    %c0_16 = arith.constant 0 : index
    %52 = vector.load %arg2[%c0_14, %c0_15, %c0_16] : memref<1x2x256xf32, #tpu.memory_space<vmem>>, vector<1x2x256xf32>
    %53 = vector.shape_cast %52 : vector<1x2x256xf32> to vector<2x256xf32>
    %54 = vector.shape_cast %51 : vector<2x256xf32> to vector<1x2x256xf32>
    tpu.vector_store %arg2[%c0_14, %c0_15, %c0_16], %54 {strides = array<i32>} : memref<1x2x256xf32, #tpu.memory_space<vmem>>, vector<1x2x256xf32>,
    return
  }
  func.func @transform_0(%arg0: i32) -> (i32, i32, i32) {
    %c0_i32 = arith.constant 0 : i32
    %c0_i32_0 = arith.constant 0 : i32
    %c0_i32_1 = arith.constant 0 : i32
    return %arg0, %c0_i32, %c0_i32_0 : i32, i32, i32
  }
  func.func @transform_1(%arg0: i32) -> (i32, i32, i32) {
    %c0_i32 = arith.constant 0 : i32
    %c0_i32_0 = arith.constant 0 : i32
    %c0_i32_1 = arith.constant 0 : i32
    return %arg0, %c0_i32, %c0_i32_0 : i32, i32, i32
  }
}

</mosaic_0001>

<llo_original>
// kernel: tpu_custom_call.1
$region0: #{tpu_custom_call.1}
  #allocation0 [shape = 'u32[]', space=smem, size = 0x4, offset = 0x4, fixed_abs, tag = 'smem constant byte address 0x4 - core index']
  #allocation1 [shape = 'u32[144,128]{1,0:T(1,128)}', space=vmem, size = 0x12000, scoped, tag = 'internal scratch']
  %s0 = inlined_call_operand.hbm [shape: f32[1,2,256], index: 0, kind: input, shape index: {}]
  %s1 = inlined_call_operand.hbm [shape: f32[1,2,256], index: 1, kind: output, shape index: {}]
  %s2 = sld [smem:[#allocation0]]
  $region18: #{tpu_custom_call.1} parent=0
    _
  %s4 = ssub.s32 1, %s2
  %s5 = scalar_select 0, %s4, %s2
  $region1: #{tpu_custom_call.1} parent=0
    #allocation2 [shape = 'u8[2048]{0}', space=vmem, size = 0x800, scoped, tag = 'input window, operand 0, single buffered']
    #allocation3 [shape = 's32[1]{0}', space=sflag, size = 0x4, scoped, tag = 'scoped memory for tpu_custom_call.1']
    #allocation4 [shape = 's32[1]{0}', space=sflag, size = 0x4, scoped, tag = 'scoped memory for tpu_custom_call.1']
    #allocation5 [shape = 'u8[2048]{0}', space=vmem, size = 0x800, scoped, tag = 'output window, operand 0, single buffered']
    %6 = vsyncpa [#allocation3], 0
    %7 = vsyncpa [#allocation4], 0
    // Predicated region
    $region2: #{tpu_custom_call.1} parent=1 // pred_check
      _
    $region3: #{tpu_custom_call.1} parent=1 // pred_check_branch
      %9 = sbr.rel (0) target = $region5
    $region4: #{tpu_custom_call.1} parent=1 // pred_region
      %s11 = ssub.s32 64, 64
      %12 = vsyncadd [#allocation3], %s11
      %s14 = sshll.u32 [#allocation2], 4
      %s15 = int_to_ptr.vmem [resolvable:$true] %s14
      %17 = dma.hbm_to_vmem [thread:$0]  %s0, 64, %s15, [#allocation3]
    $region5: #{tpu_custom_call.1} parent=1 // pred_fallthru
      _
    // Predicated region
    $region6: #{tpu_custom_call.1} parent=1 // pred_check
      _
    $region7: #{tpu_custom_call.1} parent=1 // pred_check_branch
      %19 = sbr.rel (0) target = $region9
    $region8: #{tpu_custom_call.1} parent=1 // pred_region
      %20 = dma.done [#allocation3], 64
    $region9: #{tpu_custom_call.1} parent=1 // pred_fallthru
      _
    %v21 = vld [vmem:[#allocation2] sm:$0xf]
    %v22 = vtanh.pop %v21
    %v23 = vlaneseq
    %v24 = vand.u32 %v23, 127
    %v25 = vadd.s32 %v24, 128
    %v26 = vcvt.s32.f32 %v24
    %v27 = vcvt.s32.f32 %v25
    %v28 = vadd.f32 %v26, 0.5
    %v29 = vadd.f32 %v27, 0.5
    %v30 = vmul.f32 %v28, 0.0625
    %v31 = vmul.f32 %v29, 0.0625
    %v32 = vfloor.f32 %v30
    %v33 = vfloor.f32 %v31
    %v34 = vmul.f32 %v32, 16.0
    %v35 = vmul.f32 %v33, 16.0
    %v36 = vsub.f32 %v26, %v34
    %v37 = vsub.f32 %v27, %v35
    %vm38 = vcmp.lt.f32.partialorder %v36, 0.5
    %vm39 = vcmp.lt.f32.partialorder %v37, 0.5
    %vm40 = vcmp.gt.f32.partialorder %v36, 14.5
    %vm41 = vcmp.gt.f32.partialorder %v37, 14.5
    %v44 = vunpack.c.l.s4 1983009808
    %v45 = vunpack.c.0.s8 %v44
    %v46 = vlaneseq
    %v47 = vshrl.u32 %v46, 7
    %v48 = vsub.s32 %v45, %v47
    %v49 = vrot.slane %v22, %v48
    %v50 = vcombine.high %v49, %v49
    %53 = vrot.lane.b32.xlu0 %v49, 113
    %v54 = vpop.permute.xlu0 %53
    %55 = vrot.lane.b32.xlu0 %v50, 113
    %v56 = vpop.permute.xlu0 %55
    %vm57 = vcmp.lt.s32.totalorder %v24, 113
    %v58 = vsel %vm57, %v54, %v56
    %v59 = vsel %vm57, %v56, %v54
    %60 = vrot.lane.b32.xlu0 %v49, 1
    %v61 = vpop.permute.xlu0 %60
    %62 = vrot.lane.b32.xlu0 %v50, 1
    %v63 = vpop.permute.xlu0 %62
    %vm64 = vcmp.lt.s32.totalorder %v24, 1
    %v65 = vsel %vm64, %v61, %v63
    %v66 = vsel %vm64, %v63, %v61
    %v67 = vsel %vm38, %v58, %v66
    %v68 = vsel %vm39, %v59, %v65
    %69 = vrot.lane.b32.xlu0 %v49, 15
    %v70 = vpop.permute.xlu0 %69
    %71 = vrot.lane.b32.xlu0 %v50, 15
    %v72 = vpop.permute.xlu0 %71
    %vm73 = vcmp.lt.s32.totalorder %v24, 15
    %v74 = vsel %vm73, %v70, %v72
    %v75 = vsel %vm73, %v72, %v70
    %76 = vrot.lane.b32.xlu0 %v49, 127
    %v77 = vpop.permute.xlu0 %76
    %78 = vrot.lane.b32.xlu0 %v50, 127
    %v79 = vpop.permute.xlu0 %78
    %vm80 = vcmp.lt.s32.totalorder %v24, 127
    %v81 = vsel %vm80, %v77, %v79
    %v82 = vsel %vm80, %v79, %v77
    %v83 = vsel %vm40, %v75, %v81
    %v84 = vsel %vm41, %v74, %v82
    %v87 = vcombine.low %v67, %v68
    %v89 = vunpack.c.l.s4 1983009808
    %v90 = vunpack.c.0.s8 %v89
    %v91 = vlaneseq
    %v92 = vshrl.u32 %v91, 7
    %v93 = vsub.s32 %v90, %v92
    %v94 = vrot.slane %v87, %v93
    %v96 = vadd.f32 %v22, %v94
    %v99 = vcombine.low %v83, %v84
    %v101 = vunpack.c.l.s4 1983009808
    %v102 = vunpack.c.0.s8 %v101
    %v103 = vlaneseq
    %v104 = vshrl.u32 %v103, 7
    %v105 = vsub.s32 %v102, %v104
    %v106 = vrot.slane %v99, %v105
    %v108 = vadd.f32 %v96, %v106
    %v111 = vunpack.c.l.s4 1983009808
    %v112 = vunpack.c.0.s8 %v111
    %v113 = vlaneseq
    %v114 = vshrl.u32 %v113, 7
    %v115 = vsub.s32 %v112, %v114
    %v116 = vrot.slane %v108, %v115
    %v117 = vcombine.high %v116, %v116
    %120 = vrot.lane.b32.xlu0 %v116, 16
    %v121 = vpop.permute.xlu0 %120
    %122 = vrot.lane.b32.xlu0 %v117, 16
    %v123 = vpop.permute.xlu0 %122
    %vm124 = vcmp.lt.s32.totalorder %v24, 16
    %v125 = vsel %vm124, %v121, %v123
    %v126 = vsel %vm124, %v123, %v121
    %v129 = vcombine.low %v126, %v125
    %v131 = vunpack.c.l.s4 1983009808
    %v132 = vunpack.c.0.s8 %v131
    %v133 = vlaneseq
    %v134 = vshrl.u32 %v133, 7
    %v135 = vsub.s32 %v132, %v134
    %v136 = vrot.slane %v129, %v135
    %v138 = vadd.f32 %v108, %v136
    %139 = vrot.lane.b32.xlu0 %v116, 112
    %v140 = vpop.permute.xlu0 %139
    %141 = vrot.lane.b32.xlu0 %v117, 112
    %v142 = vpop.permute.xlu0 %141
    %vm143 = vcmp.lt.s32.totalorder %v24, 112
    %v144 = vsel %vm143, %v140, %v142
    %v145 = vsel %vm143, %v142, %v140
    %v148 = vcombine.low %v144, %v145
    %v150 = vunpack.c.l.s4 1983009808
    %v151 = vunpack.c.0.s8 %v150
    %v152 = vlaneseq
    %v153 = vshrl.u32 %v152, 7
    %v154 = vsub.s32 %v151, %v153
    %v155 = vrot.slane %v148, %v154
    %v157 = vadd.f32 %v138, %v155
    %v158 = vsub.f32 %v157, %v22
    %v159 = vmul.f32 %v22, 2.077
    %v160 = vmul.f32 %v158, 2.197
    %v161 = vadd.f32 %v159, %v160
    %v162 = vadd.f32 %v161, -2.022
    %v163 = vtanh.pop %v162
    %v164 = vmul.f32 %v22, -0.02
    %v165 = vmul.f32 %v158, -0.25
    %v166 = vadd.f32 %v164, %v165
    %v167 = vadd.f32 %v166, 1.978
    %v168 = vtanh.pop %v167
    %v169 = vadd.f32 %v163, %v168
    %v170 = vmul.f32 %v169, 9.0
    %v171 = vadd.f32 %v170, -16.0
    %v172 = vtanh.pop %v171
    %173 = vst [vmem:[#allocation5] sm:$0xf] %v172
    // Predicated region
    $region10: #{tpu_custom_call.1} parent=1 // pred_check
      _
    $region11: #{tpu_custom_call.1} parent=1 // pred_check_branch
      %175 = sbr.rel (0) target = $region13
    $region12: #{tpu_custom_call.1} parent=1 // pred_region
      %s177 = ssub.s32 64, 64
      %178 = vsyncadd [#allocation4], %s177
      %s180 = sshll.u32 [#allocation5], 4
      %s181 = int_to_ptr.vmem [resolvable:$true] %s180
      %183 = dma.vmem_to_hbm [thread:$0]  %s181, 64, %s1, [#allocation4]
    $region13: #{tpu_custom_call.1} parent=1 // pred_fallthru
      _
    // Predicated region
    $region14: #{tpu_custom_call.1} parent=1 // pred_check
      _
    $region15: #{tpu_custom_call.1} parent=1 // pred_check_branch
      %185 = sbr.rel (0) target = $region17
    $region16: #{tpu_custom_call.1} parent=1 // pred_region
      %186 = dma.done [#allocation4], 64
    $region17: #{tpu_custom_call.1} parent=1 // pred_fallthru
      _
    %187 = vsyncpa [#allocation3], 1
    %188 = vsyncpa [#allocation4], 1

</llo_original>
